<compile_context>
chip_gen: v6e
topology: v6e:2x2x1
jax: 0.10.0
libtpu: 0.0.40
codegen_flags: <defaults>
</compile_context>

<pallas_src>
import functools
import math

import jax
import jax.numpy as jnp
from jax import lax
from jax.experimental import pallas as pl
from jax.experimental.pallas import tpu as pltpu


def _cdiv(a, b):
    return -(-a // b)


def _round_up(a, b):
    return _cdiv(a, b) * b


def _vmem_capacity_bytes():
    """Physical VMEM capacity in bytes (conservative fallback if the query fails)."""
    try:
        cap = int(pltpu.get_tpu_info().vmem_capacity_bytes)
    except Exception:
        cap = 64 * 1024 * 1024
    return min(max(cap, 32 * 1024 * 1024), 128 * 1024 * 1024)


def _bn_kernel(x_ref, gamma_ref, beta_ref, o_ref,
               sum_ref, sq_ref, scale_ref, shift_ref, *maybe_stage,
               tile_rows, rows, c2, groups, n_valid, eps, needs_mask, resident):
    """Fused batch-norm over a (phase, tile) grid.

    phase 0: per-lane sum / sum-of-squares of the (tile_rows, L) tile.
    phase 1, tile 0: lane-group fold + scale/shift (runs once).
    phase 1: y = x * scale + shift (lane-dense full-width stores).
    """
    phase = pl.program_id(0)
    i = pl.program_id(1)
    row0 = pl.multiple_of(i * tile_rows, 8)

    # ---------------- phase 0: per-lane statistics ------------------------------
    @pl.when(phase == 0)
    def _():
        @pl.when(i == 0)
        def _():
            sum_ref[...] = jnp.zeros_like(sum_ref)
            sq_ref[...] = jnp.zeros_like(sq_ref)

        xt = x_ref[...].astype(jnp.float32)                       # (TR, L)
        if needs_mask:
            # Rows of the clipped last tile past the array end are undefined in VMEM;
            # zero them so they do not perturb the sums.
            rid = lax.broadcasted_iota(jnp.int32, (tile_rows, xt.shape[1]), 0)
            xt = jnp.where(rid < rows - row0, xt, 0.0)
        sum_ref[...] += jnp.sum(xt, axis=0, keepdims=True)        # (1, L)
        sq_ref[...] += jnp.sum(xt * xt, axis=0, keepdims=True)    # (1, L)

        if resident:
            # Stage the raw tile so phase 1 never re-reads x from HBM (1R + 1W total).
            maybe_stage[0][pl.ds(row0, tile_rows), :] = x_ref[...]

    # ------- phase boundary: lane-group fold + scale/shift (runs once) ----------
    @pl.when(jnp.logical_and(phase == 1, i == 0))
    def _():
        s = sum_ref[...]
        q = sq_ref[...]
        # After the log2(groups) roll tree every lane holds the total of its channel
        # (lane l <-> channel l % c2; `groups` is always a power of two).
        amt = c2
        for _ in range(groups.bit_length() - 1):
            s = s + pltpu.roll(s, shift=amt, axis=1)
            q = q + pltpu.roll(q, shift=amt, axis=1)
            amt *= 2
        inv_n = 1.0 / n_valid
        mean = s * inv_n
        # E[x^2] - mean^2 can dip slightly negative in f32; clamp before rsqrt.
        # TODO(synk): for huge reductions with |mean| >> std a shifted accumulation
        #             would improve precision; the clamp prevents NaNs.
        var = jnp.maximum(q * inv_n - mean * mean, 0.0)
        inv_std = lax.rsqrt(var + eps)
        scale = gamma_ref[...] * inv_std
        scale_ref[...] = scale
        shift_ref[...] = beta_ref[...] - mean * scale

    # ---------------- phase 1: fused scale + shift ------------------------------
    @pl.when(phase == 1)
    def _():
        if resident:
            src = maybe_stage[0][pl.ds(row0, tile_rows), :]
        else:
            src = x_ref[...]
        xt = src.astype(jnp.float32)
        o_ref[...] = (xt * scale_ref[...] + shift_ref[...]).astype(o_ref.dtype)


def batch_norm_2d(x, gamma, beta, eps=1e-5, *,
                  force_streaming=False, tile_rows_cap=None):
    """x: (B, T, C1, C2); gamma, beta: (C2,). Training-mode batch norm over C2."""
    B, T, C1, C2 = x.shape
    N = B * T * C1
    flat_len = N * C2
    itemsize = jnp.dtype(x.dtype).itemsize

    # Lane-dense packing: L = lcm(C2, 128); lane l always holds channel l % C2 and
    # groups = L // C2 is a power of two.
    groups = 128 // math.gcd(C2, 128)
    L = C2 * groups

    if flat_len % L == 0:
        rows = flat_len // L
        x2 = x.reshape(rows, L)                                   # zero-copy view
        padded = False
    else:
        # TODO(synk): N % groups != 0 still takes one zero-pad copy plus an output slice;
        #             a pad-free tail would need manual DMA from the flat HBM buffer.
        rows = _cdiv(flat_len, L)
        x2 = jnp.pad(x.reshape(flat_len), (0, rows * L - flat_len)).reshape(rows, L)
        padded = True

    rows8 = _round_up(rows, 8)
    raw_bytes = rows8 * L * itemsize

    cap = _vmem_capacity_bytes()
    vmem_limit = (cap * 3) // 4                    # 96 MiB on v5e/v6e, 48 MiB on v7x
    usable = (vmem_limit * 3) // 4                 # headroom for compiler scratch

    # Per-row VMEM cost of the streaming working set: double-buffered input + output
    # tiles plus ~2 f32-sized temporaries from the in-kernel .astype(f32) math.
    row_bytes = L * (4 * itemsize + 8)
    tr = usable // row_bytes
    if tile_rows_cap is not None:
        tr = min(tr, tile_rows_cap)
    tr = max(8, (tr // 8) * 8)
    if tr >= rows:
        tile_rows, n_tiles = rows, 1               # single full-extent block (1R + 1W)
    else:
        tile_rows, n_tiles = int(tr), _cdiv(rows, tr)

    # VMEM-resident (1R + 1W) variant: stage x in VMEM during the stats phase and
    # normalize out of the stage.  Only multi-tile shapes qualify (single-tile grids
    # are already 1R + 1W because the x block index never changes).
    resident = False
    stage_rows = 0
    if (not force_streaming) and n_tiles > 1 and raw_bytes * 5 <= usable * 2:
        min_rows = _round_up(_cdiv(2 << 20, L * itemsize), 8)     # >= ~2 MiB tiles
        tr_res = max(_round_up(_cdiv(rows8, 8), 8), min_rows)     # ~8-way pipelining
        if tile_rows_cap is not None:
            tr_res = min(tr_res, max(8, (tile_rows_cap // 8) * 8))
        tr_res = max(8, (tr_res // 8) * 8)
        if tr_res < rows:
            resident = True
            tile_rows = int(tr_res)
            n_tiles = _cdiv(rows, tile_rows)
            stage_rows = n_tiles * tile_rows

    needs_mask = (rows % tile_rows) != 0

    gamma_l = jnp.tile(gamma.astype(jnp.float32), groups).reshape(1, L)
    beta_l = jnp.tile(beta.astype(jnp.float32), groups).reshape(1, L)

    scratch = [
        pltpu.VMEM((1, L), jnp.float32),   # per-lane sum
        pltpu.VMEM((1, L), jnp.float32),   # per-lane sum of squares
        pltpu.VMEM((1, L), jnp.float32),   # scale
        pltpu.VMEM((1, L), jnp.float32),   # shift
    ]
    if resident:
        scratch.append(pltpu.VMEM((stage_rows, L), x.dtype))      # staged input

    kern = functools.partial(
        _bn_kernel, tile_rows=tile_rows, rows=rows, c2=C2, groups=groups,
        n_valid=N, eps=float(eps), needs_mask=needs_mask, resident=resident)

    if resident:
        x_map = lambda p, i: ((1 - p) * i, 0)      # phase 1 pins block 0: no re-read
    else:
        x_map = lambda p, i: (i, 0)

    y2 = pl.pallas_call(
        kern,
        out_shape=jax.ShapeDtypeStruct((rows, L), x.dtype),
        grid=(2, n_tiles),
        in_specs=[
            pl.BlockSpec((tile_rows, L), x_map),
            pl.BlockSpec((1, L), lambda p, i: (0, 0)),
            pl.BlockSpec((1, L), lambda p, i: (0, 0)),
        ],
        # Phase 0 never writes y; pinning its output block index at 0 means the first
        # writeback only happens after phase 1 has produced block 0 (exactly 1W of y).
        out_specs=pl.BlockSpec((tile_rows, L), lambda p, i: (p * i, 0)),
        scratch_shapes=scratch,
        compiler_params=pltpu.CompilerParams(
            dimension_semantics=("arbitrary", "arbitrary"),
            vmem_limit_bytes=vmem_limit),
    )(x2, gamma_l, beta_l)

    if padded:
        return y2.reshape(rows * L)[:flat_len].reshape(B, T, C1, C2)
    return y2.reshape(B, T, C1, C2)


if __name__ == "__main__":
    key = jax.random.PRNGKey(0)
    eps = 1e-5

    def reference(x, gamma, beta):
        xf = x.astype(jnp.float32)
        mean = jnp.mean(xf, axis=(0, 1, 2), keepdims=True)
        var = jnp.mean((xf - mean) ** 2, axis=(0, 1, 2), keepdims=True)
        return (xf - mean) / jnp.sqrt(var + eps) * gamma + beta

    k1, k2, k3 = jax.random.split(key, 3)

    # --- Test 1: small f32, exactly-tiling lane-dense shape -> single-tile (1R+1W) path.
    B, T, C1, C2 = 2, 16, 4, 8
    x = jax.random.normal(k1, (B, T, C1, C2), dtype=jnp.float32)
    gamma = 1.0 + 0.1 * jnp.arange(C2, dtype=jnp.float32)
    beta = 0.05 * jnp.arange(C2, dtype=jnp.float32)
    y = jax.block_until_ready(batch_norm_2d(x, gamma, beta, eps=eps))
    assert y.shape == x.shape and y.dtype == x.dtype
    assert jnp.allclose(y, reference(x, gamma, beta), atol=1e-4, rtol=1e-4)

    # --- Test 2: ragged shape (N % groups != 0 -> pad fallback), forced multi-tile
    #     streaming (2R+1W) path with a masked partial last tile.
    B2, T2, C12, C22 = 3, 50, 5, 20
    x2 = jax.random.normal(k2, (B2, T2, C12, C22), dtype=jnp.float32)
    gamma2 = 1.0 - 0.02 * jnp.arange(C22, dtype=jnp.float32)
    beta2 = 0.03 * jnp.arange(C22, dtype=jnp.float32)
    y2 = jax.block_until_ready(
        batch_norm_2d(x2, gamma2, beta2, eps=eps,
                      force_streaming=True, tile_rows_cap=16))
    assert y2.shape == x2.shape and y2.dtype == x2.dtype
    assert jnp.allclose(y2, reference(x2, gamma2, beta2), atol=1e-4, rtol=1e-4)

    # --- Test 3: bf16, C2 >= 128 with C2 % 128 != 0 (lane-dense via L = lcm(160,128)=640),
    #     no pad, multi-tile VMEM-staged (1R+1W) path with a masked partial last tile.
    B3, T3, C13, C23 = 2, 7, 6, 160
    x3 = jax.random.normal(k3, (B3, T3, C13, C23), dtype=jnp.bfloat16)
    gamma3 = 1.0 + 0.05 * jnp.arange(C23, dtype=jnp.float32)
    beta3 = 0.02 * jnp.arange(C23, dtype=jnp.float32)
    y3 = jax.block_until_ready(
        batch_norm_2d(x3, gamma3, beta3, eps=eps, tile_rows_cap=8))
    assert y3.shape == x3.shape and y3.dtype == x3.dtype
    assert jnp.allclose(y3.astype(jnp.float32), reference(x3, gamma3, beta3),
                        atol=3e-2, rtol=3e-2)

    print("KERNEL_OK")
</pallas_src>

<mosaic_0001>
module attributes {stable_mosaic.version = 11 : i64} {
  func.func @_bn_kernel(%arg0: i32, %arg1: i32, %arg2: memref<8x128xf32, #tpu.memory_space<vmem>>, %arg3: memref<1x128xf32, #tpu.memory_space<vmem>>, %arg4: memref<1x128xf32, #tpu.memory_space<vmem>>, %arg5: memref<8x128xf32, #tpu.memory_space<vmem>>, %arg6: memref<1x128xf32, #tpu.memory_space<vmem>>, %arg7: memref<1x128xf32, #tpu.memory_space<vmem>>, %arg8: memref<1x128xf32, #tpu.memory_space<vmem>>, %arg9: memref<1x128xf32, #tpu.memory_space<vmem>>) attributes {dimension_semantics = [#tpu.dimension_semantics<arbitrary>, #tpu.dimension_semantics<arbitrary>], iteration_bounds = array<i64: 2, 1>, scalar_prefetch = 0 : i64, scratch_operands = 4 : i64, tpu.core_type = #tpu.core_type<tc>, window_params = [{transform_indices = @transform_0, window_bounds = array<i64: 8, 128>}, {pipeline_mode = #tpu.pipeline_mode<synchronous>, transform_indices = @transform_1, window_bounds = array<i64: 1, 128>}, {pipeline_mode = #tpu.pipeline_mode<synchronous>, transform_indices = @transform_2, window_bounds = array<i64: 1, 128>}, {transform_indices = @transform_3, window_bounds = array<i64: 8, 128>}]} {
    %c0_i32 = arith.constant 0 : i32
    %0 = arith.cmpi eq, %arg0, %c0_i32 : i32
    %1 = arith.extui %0 : i1 to i32
    %c0_i32_0 = arith.constant 0 : i32
    %2 = arith.cmpi ne, %1, %c0_i32_0 : i32
    scf.if %2 {
      %c0_i32_5 = arith.constant 0 : i32
      %11 = arith.cmpi eq, %arg1, %c0_i32_5 : i32
      %12 = arith.extui %11 : i1 to i32
      %c0_i32_6 = arith.constant 0 : i32
      %13 = arith.cmpi ne, %12, %c0_i32_6 : i32
      scf.if %13 {
        %cst_17 = arith.constant 0.000000e+00 : f32
        %26 = vector.broadcast %cst_17 : f32 to vector<1x128xf32>
        %c0_18 = arith.constant 0 : index
        %c0_19 = arith.constant 0 : index
        %27 = vector.load %arg6[%c0_18, %c0_19] : memref<1x128xf32, #tpu.memory_space<vmem>>, vector<1x128xf32>
        tpu.vector_store %arg6[%c0_18, %c0_19], %26 {strides = array<i32>} : memref<1x128xf32, #tpu.memory_space<vmem>>, vector<1x128xf32>,
        %cst_20 = arith.constant 0.000000e+00 : f32
        %28 = vector.broadcast %cst_20 : f32 to vector<1x128xf32>
        %c0_21 = arith.constant 0 : index
        %c0_22 = arith.constant 0 : index
        %29 = vector.load %arg7[%c0_21, %c0_22] : memref<1x128xf32, #tpu.memory_space<vmem>>, vector<1x128xf32>
        tpu.vector_store %arg7[%c0_21, %c0_22], %28 {strides = array<i32>} : memref<1x128xf32, #tpu.memory_space<vmem>>, vector<1x128xf32>,
      } else {
      }
      %c0 = arith.constant 0 : index
      %c0_7 = arith.constant 0 : index
      %14 = vector.load %arg2[%c0, %c0_7] : memref<8x128xf32, #tpu.memory_space<vmem>>, vector<8x128xf32>
      %c0_8 = arith.constant 0 : index
      %c0_9 = arith.constant 0 : index
      %15 = vector.load %arg6[%c0_8, %c0_9] : memref<1x128xf32, #tpu.memory_space<vmem>>, vector<1x128xf32>
      %cst = arith.constant dense<0.000000e+00> : vector<128xf32>
      %16 = vector.multi_reduction <add>, %14, %cst [0] : vector<8x128xf32> to vector<128xf32>
      %17 = vector.shape_cast %16 : vector<128xf32> to vector<1x128xf32>
      %18 = arith.addf %15, %17 : vector<1x128xf32>
      %c0_10 = arith.constant 0 : index
      %c0_11 = arith.constant 0 : index
      %19 = vector.load %arg6[%c0_10, %c0_11] : memref<1x128xf32, #tpu.memory_space<vmem>>, vector<1x128xf32>
      tpu.vector_store %arg6[%c0_10, %c0_11], %18 {strides = array<i32>} : memref<1x128xf32, #tpu.memory_space<vmem>>, vector<1x128xf32>,
      %c0_12 = arith.constant 0 : index
      %c0_13 = arith.constant 0 : index
      %20 = vector.load %arg7[%c0_12, %c0_13] : memref<1x128xf32, #tpu.memory_space<vmem>>, vector<1x128xf32>
      %21 = arith.mulf %14, %14 : vector<8x128xf32>
      %cst_14 = arith.constant dense<0.000000e+00> : vector<128xf32>
      %22 = vector.multi_reduction <add>, %21, %cst_14 [0] : vector<8x128xf32> to vector<128xf32>
      %23 = vector.shape_cast %22 : vector<128xf32> to vector<1x128xf32>
      %24 = arith.addf %20, %23 : vector<1x128xf32>
      %c0_15 = arith.constant 0 : index
      %c0_16 = arith.constant 0 : index
      %25 = vector.load %arg7[%c0_15, %c0_16] : memref<1x128xf32, #tpu.memory_space<vmem>>, vector<1x128xf32>
      tpu.vector_store %arg7[%c0_15, %c0_16], %24 {strides = array<i32>} : memref<1x128xf32, #tpu.memory_space<vmem>>, vector<1x128xf32>,
    } else {
    }
    %c1_i32 = arith.constant 1 : i32
    %3 = arith.cmpi eq, %arg0, %c1_i32 : i32
    %c0_i32_1 = arith.constant 0 : i32
    %4 = arith.cmpi eq, %arg1, %c0_i32_1 : i32
    %5 = arith.andi %3, %4 : i1
    %6 = arith.extui %5 : i1 to i32
    %c0_i32_2 = arith.constant 0 : i32
    %7 = arith.cmpi ne, %6, %c0_i32_2 : i32
    scf.if %7 {
      %c0 = arith.constant 0 : index
      %c0_5 = arith.constant 0 : index
      %11 = vector.load %arg6[%c0, %c0_5] : memref<1x128xf32, #tpu.memory_space<vmem>>, vector<1x128xf32>
      %c0_6 = arith.constant 0 : index
      %c0_7 = arith.constant 0 : index
      %12 = vector.load %arg7[%c0_6, %c0_7] : memref<1x128xf32, #tpu.memory_space<vmem>>, vector<1x128xf32>
      %c8_i32 = arith.constant 8 : i32
      %13 = tpu.dynamic_rotate %11 by %c8_i32 dim 1 : vector<1x128xf32>, i32 -> vector<1x128xf32>
      %14 = arith.addf %11, %13 : vector<1x128xf32>
      %c8_i32_8 = arith.constant 8 : i32
      %15 = tpu.dynamic_rotate %12 by %c8_i32_8 dim 1 : vector<1x128xf32>, i32 -> vector<1x128xf32>
      %16 = arith.addf %12, %15 : vector<1x128xf32>
      %c16_i32 = arith.constant 16 : i32
      %17 = tpu.dynamic_rotate %14 by %c16_i32 dim 1 : vector<1x128xf32>, i32 -> vector<1x128xf32>
      %18 = arith.addf %14, %17 : vector<1x128xf32>
      %c16_i32_9 = arith.constant 16 : i32
      %19 = tpu.dynamic_rotate %16 by %c16_i32_9 dim 1 : vector<1x128xf32>, i32 -> vector<1x128xf32>
      %20 = arith.addf %16, %19 : vector<1x128xf32>
      %c32_i32 = arith.constant 32 : i32
      %21 = tpu.dynamic_rotate %18 by %c32_i32 dim 1 : vector<1x128xf32>, i32 -> vector<1x128xf32>
      %22 = arith.addf %18, %21 : vector<1x128xf32>
      %c32_i32_10 = arith.constant 32 : i32
      %23 = tpu.dynamic_rotate %20 by %c32_i32_10 dim 1 : vector<1x128xf32>, i32 -> vector<1x128xf32>
      %24 = arith.addf %20, %23 : vector<1x128xf32>
      %c64_i32 = arith.constant 64 : i32
      %25 = tpu.dynamic_rotate %22 by %c64_i32 dim 1 : vector<1x128xf32>, i32 -> vector<1x128xf32>
      %26 = arith.addf %22, %25 : vector<1x128xf32>
      %c64_i32_11 = arith.constant 64 : i32
      %27 = tpu.dynamic_rotate %24 by %c64_i32_11 dim 1 : vector<1x128xf32>, i32 -> vector<1x128xf32>
      %28 = arith.addf %24, %27 : vector<1x128xf32>
      %cst = arith.constant 7.812500e-03 : f32
      %29 = vector.broadcast %cst : f32 to vector<1x128xf32>
      %30 = arith.mulf %26, %29 : vector<1x128xf32>
      %cst_12 = arith.constant 7.812500e-03 : f32
      %31 = vector.broadcast %cst_12 : f32 to vector<1x128xf32>
      %32 = arith.mulf %28, %31 : vector<1x128xf32>
      %33 = arith.mulf %30, %30 : vector<1x128xf32>
      %34 = arith.subf %32, %33 : vector<1x128xf32>
      %cst_13 = arith.constant 0.000000e+00 : f32
      %35 = vector.broadcast %cst_13 : f32 to vector<1x128xf32>
      %36 = arith.maximumf %34, %35 : vector<1x128xf32>
      %cst_14 = arith.constant 9.99999974E-6 : f32
      %37 = vector.broadcast %cst_14 : f32 to vector<1x128xf32>
      %38 = arith.addf %36, %37 : vector<1x128xf32>
      %39 = math.rsqrt %38 : vector<1x128xf32>
      %c0_15 = arith.constant 0 : index
      %c0_16 = arith.constant 0 : index
      %40 = vector.load %arg3[%c0_15, %c0_16] : memref<1x128xf32, #tpu.memory_space<vmem>>, vector<1x128xf32>
      %41 = arith.mulf %40, %39 : vector<1x128xf32>
      %c0_17 = arith.constant 0 : index
      %c0_18 = arith.constant 0 : index
      %42 = vector.load %arg8[%c0_17, %c0_18] : memref<1x128xf32, #tpu.memory_space<vmem>>, vector<1x128xf32>
      tpu.vector_store %arg8[%c0_17, %c0_18], %41 {strides = array<i32>} : memref<1x128xf32, #tpu.memory_space<vmem>>, vector<1x128xf32>,
      %c0_19 = arith.constant 0 : index
      %c0_20 = arith.constant 0 : index
      %43 = vector.load %arg4[%c0_19, %c0_20] : memref<1x128xf32, #tpu.memory_space<vmem>>, vector<1x128xf32>
      %44 = arith.mulf %30, %41 : vector<1x128xf32>
      %45 = arith.subf %43, %44 : vector<1x128xf32>
      %c0_21 = arith.constant 0 : index
      %c0_22 = arith.constant 0 : index
      %46 = vector.load %arg9[%c0_21, %c0_22] : memref<1x128xf32, #tpu.memory_space<vmem>>, vector<1x128xf32>
      tpu.vector_store %arg9[%c0_21, %c0_22], %45 {strides = array<i32>} : memref<1x128xf32, #tpu.memory_space<vmem>>, vector<1x128xf32>,
    } else {
    }
    %c1_i32_3 = arith.constant 1 : i32
    %8 = arith.cmpi eq, %arg0, %c1_i32_3 : i32
    %9 = arith.extui %8 : i1 to i32
    %c0_i32_4 = arith.constant 0 : i32
    %10 = arith.cmpi ne, %9, %c0_i32_4 : i32
    scf.if %10 {
      %c0 = arith.constant 0 : index
      %c0_5 = arith.constant 0 : index
      %11 = vector.load %arg2[%c0, %c0_5] : memref<8x128xf32, #tpu.memory_space<vmem>>, vector<8x128xf32>
      %c0_6 = arith.constant 0 : index
      %c0_7 = arith.constant 0 : index
      %12 = vector.load %arg8[%c0_6, %c0_7] : memref<1x128xf32, #tpu.memory_space<vmem>>, vector<1x128xf32>
      %13 = vector.broadcast %12 : vector<1x128xf32> to vector<8x128xf32>
      %14 = arith.mulf %11, %13 : vector<8x128xf32>
      %c0_8 = arith.constant 0 : index
      %c0_9 = arith.constant 0 : index
      %15 = vector.load %arg9[%c0_8, %c0_9] : memref<1x128xf32, #tpu.memory_space<vmem>>, vector<1x128xf32>
      %16 = vector.broadcast %15 : vector<1x128xf32> to vector<8x128xf32>
      %17 = arith.addf %14, %16 : vector<8x128xf32>
      %c0_10 = arith.constant 0 : index
      %c0_11 = arith.constant 0 : index
      %18 = vector.load %arg5[%c0_10, %c0_11] : memref<8x128xf32, #tpu.memory_space<vmem>>, vector<8x128xf32>
      tpu.vector_store %arg5[%c0_10, %c0_11], %17 {strides = array<i32>} : memref<8x128xf32, #tpu.memory_space<vmem>>, vector<8x128xf32>,
    } else {
    }
    return
  }
  func.func @transform_0(%arg0: i32, %arg1: i32) -> (i32, i32) {
    %c0_i32 = arith.constant 0 : i32
    %c0_i32_0 = arith.constant 0 : i32
    return %arg1, %c0_i32 : i32, i32
  }
  func.func @transform_1(%arg0: i32, %arg1: i32) -> (i32, i32) {
    %c0_i32 = arith.constant 0 : i32
    %c0_i32_0 = arith.constant 0 : i32
    %c0_i32_1 = arith.constant 0 : i32
    return %c0_i32, %c0_i32_0 : i32, i32
  }
  func.func @transform_2(%arg0: i32, %arg1: i32) -> (i32, i32) {
    %c0_i32 = arith.constant 0 : i32
    %c0_i32_0 = arith.constant 0 : i32
    %c0_i32_1 = arith.constant 0 : i32
    return %c0_i32, %c0_i32_0 : i32, i32
  }
  func.func @transform_3(%arg0: i32, %arg1: i32) -> (i32, i32) {
    %0 = arith.muli %arg0, %arg1 : i32
    %c0_i32 = arith.constant 0 : i32
    %c0_i32_0 = arith.constant 0 : i32
    return %0, %c0_i32 : i32, i32
  }
}

</mosaic_0001>

<llo_original>
// kernel: tpu_custom_call.1
$region0: #{tpu_custom_call.1}
  #allocation0 [shape = 'u32[]', space=smem, size = 0x4, offset = 0x4, fixed_abs, tag = 'smem constant byte address 0x4 - core index']
  #allocation1 [shape = 'u32[144,128]{1,0:T(1,128)}', space=vmem, size = 0x12000, scoped, tag = 'internal scratch']
  #allocation2 [shape = 'f32[1,128]{1,0:T(1,128)}', space=vmem, size = 0x200, scoped, tag = 'scratch operand']
  #allocation3 [shape = 'f32[1,128]{1,0:T(1,128)}', space=vmem, size = 0x200, scoped, tag = 'scratch operand']
  #allocation4 [shape = 'f32[1,128]{1,0:T(1,128)}', space=vmem, size = 0x200, scoped, tag = 'scratch operand']
  #allocation5 [shape = 'f32[1,128]{1,0:T(1,128)}', space=vmem, size = 0x200, scoped, tag = 'scratch operand']
  %s0 = inlined_call_operand.hbm [shape: f32[8,128], index: 0, kind: input, shape index: {}]
  %s1 = inlined_call_operand.vmem [shape: f32[1,128], index: 1, kind: input, shape index: {}]
  %s2 = inlined_call_operand.vmem [shape: f32[1,128], index: 2, kind: input, shape index: {}]
  %s3 = inlined_call_operand.hbm [shape: f32[8,128], index: 3, kind: output, shape index: {}]
  %s4 = sld [smem:[#allocation0]]
  $region65: #{tpu_custom_call.1} parent=0
    _
  %s6 = ssub.s32 1, %s4
  %s7 = scalar_select 0, %s6, %s4
  $region1: #{tpu_custom_call.1} parent=0
    #allocation6 [shape = 'u8[4096]{0}', space=vmem, size = 0x1000, scoped, tag = 'input window, operand 0, single buffered']
    #allocation7 [shape = 's32[2]{0}', space=sflag, size = 0x8, scoped, tag = 'scoped memory for tpu_custom_call.1']
    #allocation8 [shape = 's32[2]{0}', space=sflag, size = 0x8, scoped, tag = 'scoped memory for tpu_custom_call.1']
    #allocation9 [shape = 'u8[8192]{0}', space=vmem, size = 0x2000, scoped, tag = 'output window, operand 0']
    %8 = vsyncpa [#allocation7], 0
    %9 = vsyncpa [#allocation8], 0
    %s10 = scalar_lea.sflag [#allocation8], 1
    %11 = vsyncpa %s10, 0
    loop: start=0, step=1, limit=4
    $region2: #{tpu_custom_call.1} parent=1 // loop_pre_header
      _
    $region3: #{tpu_custom_call.1} parent=1 // loop_header
      %s13 = sphi 0, %s17
      %p14 = scmp.ge.s32.totalorder %s13, 4
      %s20 = sphi 0, %s32
      %s21 = sphi 0, %s28
      %s22 = sphi 0, %s20
      %s23 = sphi 0, %s21
      %s24 = sphi 0, %s22
      %s25 = sphi 0, %s23
      %s35 = sphi 0, %s37
      %s38 = sphi 0, %s35
      %s39 = sphi 0, %s38
      %s55 = sphi 0, %s39
      %s59 = sphi 0, %s59
      %s61 = sphi 0, %s59
      %s62 = sphi 0, %s61
      %s76 = sphi 0, %s62
      %s80 = sphi 0, %s80
      %s82 = sphi 0, %s80
      %s83 = sphi 0, %s82
      %s97 = sphi 0, %s83
      %s105 = sphi 0, %s107
      %s108 = sphi 0, %s105
      %s109 = sphi 0, %s108
      %s125 = sphi 0, %s109
    $region4: #{tpu_custom_call.1} parent=1 // loop_header_branch
      %16 = sbr.rel (%p14) target = $region8
    $region5: #{tpu_custom_call.1} parent=1 // loop_body
      %s18 = ssub.s32 %s13, 1
      %s19 = ssub.s32 %s13, 2
      %s26 = sadd.s32 1, %s21
      %p27 = scmp.ge.s32.totalorder %s26, 1
      %s28 = scalar_select %p27, 0, %s26
      %s29 = sadd.s32 1, %s20
      %s30 = scalar_select %p27, %s29, %s20
      %p31 = scmp.ge.s32.totalorder %s30, 2
      %s32 = scalar_select %p31, 0, %s30
      %s33 = ssub.s32 %s21, %s28
      %p34 = scmp.eq.s32.totalorder %s33, 0
      %s36 = sadd.s32 %s35, 1
      %s37 = scalar_select %p34, %s35, %s36
      %p40 = pneg %p34
      %p41 = scmp.eq.s32.totalorder %s13, 1
      %p42 = por %p40, %p41
      %p43 = scmp.ne.s32.totalorder %s35, %s38
      %p44 = scmp.eq.s32.totalorder %s13, 0
      %p45 = por %p43, %p44
      %p46 = scmp.ne.s32.totalorder %s35, %s38
      %p47 = scmp.eq.s32.totalorder %s18, 1
      %p48 = por %p46, %p47
      %p49 = scmp.ne.s32.totalorder %s38, %s39
      %p50 = scmp.eq.s32.totalorder %s18, 0
      %p51 = por %p49, %p50
      %p52 = scmp.ne.s32.totalorder %s38, %s39
      %p53 = scmp.eq.s32.totalorder %s19, 1
      %p54 = por %p52, %p53
      %p56 = scmp.ne.s32.totalorder %s39, %s55
      %p57 = scmp.eq.s32.totalorder %s19, 0
      %p58 = por %p56, %p57
      %s60 = sadd.s32 %s59, 1
      %p63 = scmp.eq.s32.totalorder %s13, 1
      %p64 = scmp.ne.s32.totalorder %s59, %s61
      %p65 = scmp.eq.s32.totalorder %s13, 0
      %p66 = por %p64, %p65
      %p67 = scmp.ne.s32.totalorder %s59, %s61
      %p68 = scmp.eq.s32.totalorder %s18, 1
      %p69 = por %p67, %p68
      %p70 = scmp.ne.s32.totalorder %s61, %s62
      %p71 = scmp.eq.s32.totalorder %s18, 0
      %p72 = por %p70, %p71
      %p73 = scmp.ne.s32.totalorder %s61, %s62
      %p74 = scmp.eq.s32.totalorder %s19, 1
      %p75 = por %p73, %p74
      %p77 = scmp.ne.s32.totalorder %s62, %s76
      %p78 = scmp.eq.s32.totalorder %s19, 0
      %p79 = por %p77, %p78
      %s81 = sadd.s32 %s80, 1
      %p84 = scmp.eq.s32.totalorder %s13, 1
      %p85 = scmp.ne.s32.totalorder %s80, %s82
      %p86 = scmp.eq.s32.totalorder %s13, 0
      %p87 = por %p85, %p86
      %p88 = scmp.ne.s32.totalorder %s80, %s82
      %p89 = scmp.eq.s32.totalorder %s18, 1
      %p90 = por %p88, %p89
      %p91 = scmp.ne.s32.totalorder %s82, %s83
      %p92 = scmp.eq.s32.totalorder %s18, 0
      %p93 = por %p91, %p92
      %p94 = scmp.ne.s32.totalorder %s82, %s83
      %p95 = scmp.eq.s32.totalorder %s19, 1
      %p96 = por %p94, %p95
      %p98 = scmp.ne.s32.totalorder %s83, %s97
      %p99 = scmp.eq.s32.totalorder %s19, 0
      %p100 = por %p98, %p99
      %s101 = smul.u32 %s20, %s21
      %s102 = smul.u32 %s32, %s28
      %s103 = ssub.s32 %s101, %s102
      %p104 = scmp.eq.s32.totalorder %s103, 0
      %s106 = sadd.s32 %s105, 1
      %s107 = scalar_select %p104, %s105, %s106
      %p110 = pneg %p104
      %p111 = scmp.eq.s32.totalorder %s13, 1
      %p112 = por %p110, %p111
      %p113 = scmp.ne.s32.totalorder %s105, %s108
      %p114 = scmp.eq.s32.totalorder %s13, 0
      %p115 = por %p113, %p114
      %p116 = scmp.ne.s32.totalorder %s105, %s108
      %p117 = scmp.eq.s32.totalorder %s18, 1
      %p118 = por %p116, %p117
      %p119 = scmp.ne.s32.totalorder %s108, %s109
      %p120 = scmp.eq.s32.totalorder %s18, 0
      %p121 = por %p119, %p120
      %p122 = scmp.ne.s32.totalorder %s108, %s109
      %p123 = scmp.eq.s32.totalorder %s19, 1
      %p124 = por %p122, %p123
      %p126 = scmp.ne.s32.totalorder %s109, %s125
      %p127 = scmp.eq.s32.totalorder %s19, 0
      %p128 = por %p126, %p127
      %p129 = scmp.le.s32.totalorder 1, %s13
      %p130 = scmp.lt.s32.totalorder %s13, 3
      %p131 = pnand %p129, %p130
      %p132 = pneg %p131
      // Predicated region
      $region9: #{tpu_custom_call.1} parent=5 // pred_check
        _
      $region10: #{tpu_custom_call.1} parent=5 // pred_check_branch
        %134 = sbr.rel (%p131) target = $region12
      $region11: #{tpu_custom_call.1} parent=5 // pred_region
        %s135 = ssub.s32 %s13, 1
        // Predicated region
        $region13: #{tpu_custom_call.1} parent=11 // pred_check
          %p136 = pneg %p51
        $region14: #{tpu_custom_call.1} parent=11 // pred_check_branch
          %138 = sbr.rel (%p136) target = $region16
        $region15: #{tpu_custom_call.1} parent=11 // pred_region
          %s140 = ssub.s32 128, 128
          %141 = vsyncadd [#allocation7], %s140
          %s142 = smul.addr %s23, 128
          %s143 = scalar_lea.hbm %s0, %s142
          %s145 = sshll.u32 [#allocation6], 4
          %s146 = int_to_ptr.vmem [resolvable:$true] %s145
          %148 = dma.hbm_to_vmem [thread:$0]  %s143, 128, %s146, [#allocation7]
        $region16: #{tpu_custom_call.1} parent=11 // pred_fallthru
          _
        // Predicated region
        $region17: #{tpu_custom_call.1} parent=11 // pred_check
          %p149 = pneg %p72
        $region18: #{tpu_custom_call.1} parent=11 // pred_check_branch
          %151 = sbr.rel (%p149) target = $region20
        $region19: #{tpu_custom_call.1} parent=11 // pred_region
          _
        $region20: #{tpu_custom_call.1} parent=11 // pred_fallthru
          _
        // Predicated region
        $region21: #{tpu_custom_call.1} parent=11 // pred_check
          %p152 = pneg %p93
        $region22: #{tpu_custom_call.1} parent=11 // pred_check_branch
          %154 = sbr.rel (%p152) target = $region24
        $region23: #{tpu_custom_call.1} parent=11 // pred_region
          _
        $region24: #{tpu_custom_call.1} parent=11 // pred_fallthru
          _
      $region12: #{tpu_custom_call.1} parent=5 // pred_fallthru
        _
      %p155 = scmp.lt.s32.totalorder %s13, 2
      // Predicated region
      $region25: #{tpu_custom_call.1} parent=5 // pred_check
        %p156 = pneg %p155
      $region26: #{tpu_custom_call.1} parent=5 // pred_check_branch
        %158 = sbr.rel (%p156) target = $region28
      $region27: #{tpu_custom_call.1} parent=5 // pred_region
        _
      $region28: #{tpu_custom_call.1} parent=5 // pred_fallthru
        _
      %p159 = scmp.le.s32.totalorder 1, %s13
      %p160 = scmp.lt.s32.totalorder %s13, 3
      %p161 = pnand %p159, %p160
      %p162 = pneg %p161
      // Predicated region
      $region29: #{tpu_custom_call.1} parent=5 // pred_check
        _
      $region30: #{tpu_custom_call.1} parent=5 // pred_check_branch
        %164 = sbr.rel (%p161) target = $region32
      $region31: #{tpu_custom_call.1} parent=5 // pred_region
        %s165 = ssub.s32 %s13, 1
        // Predicated region
        $region33: #{tpu_custom_call.1} parent=31 // pred_check
          %p166 = pneg %p51
        $region34: #{tpu_custom_call.1} parent=31 // pred_check_branch
          %168 = sbr.rel (%p166) target = $region36
        $region35: #{tpu_custom_call.1} parent=31 // pred_region
          %169 = dma.done [#allocation7], 128
        $region36: #{tpu_custom_call.1} parent=31 // pred_fallthru
          _
        %p170 = pneg %p51
        %p171 = pneg %p48
        %p172 = pneg %p72
        %p173 = pneg %p69
        %p174 = pneg %p93
        %p175 = pneg %p90
        %p176 = pneg %p121
        %p177 = pneg %p118
        %s178 = sand.u32 %s108, 1
        %s179 = scalar_lea.sflag [#allocation8], %s178
        %s180 = sand.u32 %s108, 1
        %s181 = smul.addr %s180, 8
        %s182 = scalar_lea.vmem [#allocation9], %s181
        %s183 = smul.u32 %s22, %s23
        %p184 = scmp.eq.s32.totalorder %s22, 0
        // Predicated region
        $region37: #{tpu_custom_call.1} parent=31 // pred_check
          %p185 = pneg %p184
        $region38: #{tpu_custom_call.1} parent=31 // pred_check_branch
          %187 = sbr.rel (%p185) target = $region40
        $region39: #{tpu_custom_call.1} parent=31 // pred_region
          %p188 = scmp.eq.s32.totalorder %s23, 0
          // Predicated region
          $region41: #{tpu_custom_call.1} parent=39 // pred_check
            %p189 = pneg %p188
          $region42: #{tpu_custom_call.1} parent=39 // pred_check_branch
            %191 = sbr.rel (%p189) target = $region44
          $region43: #{tpu_custom_call.1} parent=39 // pred_region
            %192 = vst [vmem:[#allocation2] sm:$0x1] 0.0
            %193 = vst [vmem:[#allocation3] sm:$0x1] 0.0
          $region44: #{tpu_custom_call.1} parent=39 // pred_fallthru
            _
          %v194 = vld [vmem:[#allocation6] sm:$0xff]
          %v195 = vld [vmem:[#allocation2] sm:$0x1]
          %v196 = vrot.slane %v194, 4
          %v197 = vadd.f32 %v194, %v196
          %v198 = vrot.slane %v197, 2
          %v199 = vadd.f32 %v197, %v198
          %v200 = vrot.slane %v199, 1
          %v201 = vadd.f32 %v199, %v200
          %v202 = vadd.f32 %v195, %v201
          %203 = vst [vmem:[#allocation2] sm:$0x1] %v202
          %v204 = vld [vmem:[#allocation3] sm:$0x1]
          %v205 = vmul.f32 %v194, %v194
          %v206 = vrot.slane %v205, 4
          %v207 = vadd.f32 %v205, %v206
          %v208 = vrot.slane %v207, 2
          %v209 = vadd.f32 %v207, %v208
          %v210 = vrot.slane %v209, 1
          %v211 = vadd.f32 %v209, %v210
          %v212 = vadd.f32 %v204, %v211
          %213 = vst [vmem:[#allocation3] sm:$0x1] %v212
        $region40: #{tpu_custom_call.1} parent=31 // pred_fallthru
          _
        %p214 = scmp.eq.s32.totalorder %s22, 1
        %p215 = scmp.eq.s32.totalorder %s23, 0
        %p216 = pnand %p214, %p215
        %p217 = pneg %p216
        // Predicated region
        $region45: #{tpu_custom_call.1} parent=31 // pred_check
          _
        $region46: #{tpu_custom_call.1} parent=31 // pred_check_branch
          %219 = sbr.rel (%p216) target = $region48
        $region47: #{tpu_custom_call.1} parent=31 // pred_region
          %v220 = vld [vmem:[#allocation2] sm:$0x1]
          %v221 = vld [vmem:[#allocation3] sm:$0x1]
          %222 = vrot.lane.b32.xlu0 %v220, 8
          %v223 = vpop.permute.xlu0 %222
          %v224 = vadd.f32 %v220, %v223
          %225 = vrot.lane.b32.xlu0 %v221, 8
          %v226 = vpop.permute.xlu0 %225
          %v227 = vadd.f32 %v221, %v226
          %228 = vrot.lane.b32.xlu0 %v224, 16
          %v229 = vpop.permute.xlu0 %228
          %v230 = vadd.f32 %v224, %v229
          %231 = vrot.lane.b32.xlu0 %v227, 16
          %v232 = vpop.permute.xlu0 %231
          %v233 = vadd.f32 %v227, %v232
          %234 = vrot.lane.b32.xlu0 %v230, 32
          %v235 = vpop.permute.xlu0 %234
          %v236 = vadd.f32 %v230, %v235
          %237 = vrot.lane.b32.xlu0 %v233, 32
          %v238 = vpop.permute.xlu0 %237
          %v239 = vadd.f32 %v233, %v238
          %240 = vrot.lane.b32.xlu0 %v236, 64
          %v241 = vpop.permute.xlu0 %240
          %v242 = vadd.f32 %v236, %v241
          %243 = vrot.lane.b32.xlu0 %v239, 64
          %v244 = vpop.permute.xlu0 %243
          %v245 = vadd.f32 %v239, %v244
          %v246 = vmul.f32 %v242, 0.0078125
          %v247 = vmul.f32 %v245, 0.0078125
          %v248 = vmul.f32 %v246, %v246
          %v249 = vsub.f32 %v247, %v248
          %v250 = vmax.f32 %v249, 0.0
          %v251 = vadd.f32 %v250, 1e-05
          %v252 = vrsqrt.pop %v251
          %v253 = vld [vmem:[%s1] sm:$0x1]
          %v254 = vmul.f32 %v253, %v252
          %255 = vst [vmem:[#allocation4] sm:$0x1] %v254
          %v256 = vld [vmem:[%s2] sm:$0x1]
          %v257 = vmul.f32 %v246, %v254
          %v258 = vsub.f32 %v256, %v257
          %259 = vst [vmem:[#allocation5] sm:$0x1] %v258
        $region48: #{tpu_custom_call.1} parent=31 // pred_fallthru
          _
        // Predicated region
        $region49: #{tpu_custom_call.1} parent=31 // pred_check
          %p260 = pneg %p214
        $region50: #{tpu_custom_call.1} parent=31 // pred_check_branch
          %262 = sbr.rel (%p260) target = $region52
        $region51: #{tpu_custom_call.1} parent=31 // pred_region
          %v263 = vld [vmem:[#allocation6] sm:$0xff]
          %v264 = vld [vmem:[#allocation4] sm:$0x1]
          %v266 = vlaneseq
          %v267 = vshrl.u32 %v266, 7
          %v268 = vsub.s32 0, %v267
          %v269 = vrot.slane %v264, %v268
          %v271 = vmul.f32 %v263, %v269
          %v272 = vld [vmem:[#allocation5] sm:$0x1]
          %v274 = vlaneseq
          %v275 = vshrl.u32 %v274, 7
          %v276 = vsub.s32 0, %v275
          %v277 = vrot.slane %v272, %v276
          %v279 = vadd.f32 %v271, %v277
          %280 = vst [vmem:[%s182] sm:$0xff] %v279
        $region52: #{tpu_custom_call.1} parent=31 // pred_fallthru
          _
        %s281 = sand.u32 %s108, 1
        %s282 = scalar_lea.sflag [#allocation8], %s281
        %s283 = sand.u32 %s108, 1
        %s284 = smul.addr %s283, 8
        %s285 = scalar_lea.vmem [#allocation9], %s284
        // Predicated region
        $region53: #{tpu_custom_call.1} parent=31 // pred_check
          %p286 = pneg %p118
        $region54: #{tpu_custom_call.1} parent=31 // pred_check_branch
          %288 = sbr.rel (%p286) target = $region56
        $region55: #{tpu_custom_call.1} parent=31 // pred_region
          %s289 = smul.u32 %s22, %s23
          %s291 = ssub.s32 128, 128
          %292 = vsyncadd %s282, %s291
          %s293 = smul.addr %s289, 128
          %s294 = scalar_lea.hbm %s3, %s293
          %s296 = sshll.u32 %s285, 4
          %s297 = int_to_ptr.vmem [resolvable:$true] %s296
          %299 = dma.vmem_to_hbm [thread:$0]  %s297, 128, %s294, %s282
        $region56: #{tpu_custom_call.1} parent=31 // pred_fallthru
          _
      $region32: #{tpu_custom_call.1} parent=5 // pred_fallthru
        _
      %p300 = scmp.le.s32.totalorder 2, %s13
      // Predicated region
      $region57: #{tpu_custom_call.1} parent=5 // pred_check
        %p301 = pneg %p300
      $region58: #{tpu_custom_call.1} parent=5 // pred_check_branch
        %303 = sbr.rel (%p301) target = $region60
      $region59: #{tpu_custom_call.1} parent=5 // pred_region
        %s304 = ssub.s32 %s13, 2
        // Predicated region
        $region61: #{tpu_custom_call.1} parent=59 // pred_check
          %p305 = pneg %p124
        $region62: #{tpu_custom_call.1} parent=59 // pred_check_branch
          %307 = sbr.rel (%p305) target = $region64
        $region63: #{tpu_custom_call.1} parent=59 // pred_region
          %s308 = sand.u32 %s109, 1
          %s309 = scalar_lea.sflag [#allocation8], %s308
          %s310 = sand.u32 %s109, 1
          %s311 = smul.addr %s310, 8
          %s312 = scalar_lea.vmem [#allocation9], %s311
          %313 = dma.done %s309, 128
        $region64: #{tpu_custom_call.1} parent=59 // pred_fallthru
          _
      $region60: #{tpu_custom_call.1} parent=5 // pred_fallthru
        _
    $region6: #{tpu_custom_call.1} parent=1 // loop_footer
      %s17 = sadd.s32 1, %s13
    $region7: #{tpu_custom_call.1} parent=1 // loop_footer_branch
      %12 = sbr.rel target = $region3
    $region8: #{tpu_custom_call.1} parent=1 // loop_exit
      _
    %314 = vsyncpa [#allocation7], 1
    %s315 = scalar_lea.sflag [#allocation7], 1
    %316 = vsyncpa %s315, 1
    %317 = vsyncpa [#allocation8], 1
    %s318 = scalar_lea.sflag [#allocation8], 1
    %319 = vsyncpa %s318, 1

</llo_original>
